<compile_context>
chip_gen: v5e
topology: v5e:2x2
jax: 0.10.0
libtpu: 0.0.40
codegen_flags: <defaults>
</compile_context>

<pallas_src>
import numpy as np
import jax
import jax.numpy as jnp
from jax import lax
from jax.experimental import pallas as pl
from jax.experimental.pallas import tpu as pltpu

_BN_EPS = 1e-5


def _res_mlp_kernel(x_ref, w1_ref, g_ref, beta_ref, w2_ref, b2_ref, o_ref):
    """Whole Res_MLP forward in one invocation (all operands resident in VMEM)."""
    x = x_ref[...]                                            # (B, D) f32

    # ---- Linear 1 (b1 omitted: cancels exactly under training-mode BatchNorm) ----
    w1 = w1_ref[...].astype(jnp.float32)                      # bf16 storage -> f32
    h = jnp.dot(x, w1, preferred_element_type=jnp.float32)    # (B, H) f32

    # ---- BatchNorm1d (training mode, biased variance) — one-pass statistics ----
    e_h = jnp.mean(h, axis=0, keepdims=True)                  # (1, H)
    e_h2 = jnp.mean(h * h, axis=0, keepdims=True)             # (1, H)
    var = e_h2 - e_h * e_h
    scale = g_ref[...] * lax.rsqrt(var + _BN_EPS)             # gamma / sqrt(var+eps)
    shift = beta_ref[...] - e_h * scale                       # beta  - mean*scale

    # ---- ReLU (fused with the BN affine) ----
    h = jnp.maximum(h * scale + shift, 0.0)

    # ---- Linear 2 + bias + residual (bn_last=False, relu_last=False) ----
    w2 = w2_ref[...].astype(jnp.float32)
    out = jnp.dot(h, w2, preferred_element_type=jnp.float32) + b2_ref[...] + x
    o_ref[...] = out.astype(o_ref.dtype)


@jax.jit
def res_mlp_forward(x, w1, b1, gamma, beta, w2, b2):
    """Pallas implementation of Res_MLP.forward(x) (training-mode BatchNorm).

    w1 / w2 may be passed as bf16 (recommended: halves HBM traffic of this
    HBM-bound kernel); they are upcast to f32 inside the kernel and every dot
    accumulates in f32.
    """
    del b1  # exact algebraic no-op under training-mode BatchNorm (see header note)
    B, D = x.shape
    H = w1.shape[1]
    P = w2.shape[1]
    assert P == D, "residual add requires projection_size == dim"

    flops = 2 * B * D * H + 2 * B * H * P + 8 * B * H
    bytes_accessed = (
        sum(int(a.size) * a.dtype.itemsize for a in (x, w1, gamma, beta, w2, b2))
        + B * P * x.dtype.itemsize
    )

    vmem_spec = pl.BlockSpec(memory_space=pltpu.MemorySpace.VMEM)
    return pl.pallas_call(
        _res_mlp_kernel,
        out_shape=jax.ShapeDtypeStruct((B, P), x.dtype),
        in_specs=[vmem_spec] * 6,
        out_specs=vmem_spec,
        cost_estimate=pl.CostEstimate(
            flops=flops, transcendentals=H, bytes_accessed=bytes_accessed),
    )(x, w1, gamma, beta, w2, b2)


def _reference(x, w1, b1, gamma, beta, w2, b2):
    """Pure-JAX reference matching the PyTorch module (training-mode BN, incl. b1)."""
    h = x @ w1 + b1
    mean = h.mean(axis=0, keepdims=True)
    var = ((h - mean) ** 2).mean(axis=0, keepdims=True)
    h = (h - mean) / jnp.sqrt(var + _BN_EPS) * gamma + beta
    h = jnp.maximum(h, 0.0)
    return h @ w2 + b2 + x


if __name__ == "__main__":
    # dim = projection_size = 128, hidden_size = 256, num_layer = 2, batch = 128
    # (B >= 128 keeps the MXU M-dimension filled; everything still fits VMEM easily).
    B, D, H = 128, 128, 256
    key = jax.random.PRNGKey(0)
    kx, k1, k2, k3, k4, k5, k6 = jax.random.split(key, 7)

    x = jax.random.normal(kx, (B, D), dtype=jnp.float32)

    # Deterministic parameter init (shapes from nn.Linear / nn.BatchNorm1d).
    w1 = jax.random.normal(k1, (D, H), dtype=jnp.float32) * 0.02
    b1 = jax.random.normal(k2, (1, H), dtype=jnp.float32) * 0.02
    gamma = 1.0 + 0.1 * jax.random.normal(k3, (1, H), dtype=jnp.float32)
    beta = 0.1 * jax.random.normal(k4, (1, H), dtype=jnp.float32)
    w2 = jax.random.normal(k5, (H, D), dtype=jnp.float32) * 0.02
    b2 = jax.random.normal(k6, (1, D), dtype=jnp.float32) * 0.02

    # Per the perf review: store/stream the two weight matrices as bf16.
    w1_bf16 = w1.astype(jnp.bfloat16)
    w2_bf16 = w2.astype(jnp.bfloat16)

    out = res_mlp_forward(x, w1_bf16, b1, gamma, beta, w2_bf16, b2)
    out = jax.block_until_ready(out)

    # Tight check against a reference using the same bf16-stored weights
    # (isolates kernel math from the weight storage-dtype choice).
    ref_bf16_w = _reference(x, w1_bf16.astype(jnp.float32), b1, gamma, beta,
                            w2_bf16.astype(jnp.float32), b2)
    np.testing.assert_allclose(np.asarray(out), np.asarray(ref_bf16_w),
                               rtol=1e-4, atol=1e-4)

    # Loose check against exact f32 module semantics (difference is only the
    # bf16 quantization of the 0.02-scaled weights).
    ref_f32 = _reference(x, w1, b1, gamma, beta, w2, b2)
    np.testing.assert_allclose(np.asarray(out), np.asarray(ref_f32),
                               rtol=5e-2, atol=5e-2)

    print("KERNEL_OK")
</pallas_src>

<mosaic_0001>
module attributes {stable_mosaic.version = 11 : i64} {
  func.func @_res_mlp_kernel(%arg0: memref<128x128xf32, #tpu.memory_space<vmem>>, %arg1: memref<128x256xbf16, #tpu.memory_space<vmem>>, %arg2: memref<1x256xf32, #tpu.memory_space<vmem>>, %arg3: memref<1x256xf32, #tpu.memory_space<vmem>>, %arg4: memref<256x128xbf16, #tpu.memory_space<vmem>>, %arg5: memref<1x128xf32, #tpu.memory_space<vmem>>, %arg6: memref<128x128xf32, #tpu.memory_space<vmem>>) attributes {dimension_semantics = [], scalar_prefetch = 0 : i64, scratch_operands = 0 : i64, tpu.core_type = #tpu.core_type<tc>} {
    %c0 = arith.constant 0 : index
    %c0_0 = arith.constant 0 : index
    %0 = vector.load %arg0[%c0, %c0_0] : memref<128x128xf32, #tpu.memory_space<vmem>>, vector<128x128xf32>
    %c0_1 = arith.constant 0 : index
    %c0_2 = arith.constant 0 : index
    %1 = vector.load %arg1[%c0_1, %c0_2] : memref<128x256xbf16, #tpu.memory_space<vmem>>, vector<128x256xbf16>
    %2 = arith.extf %1 : vector<128x256xbf16> to vector<128x256xf32>
    %cst = arith.constant dense<0.000000e+00> : vector<128x256xf32>
    %3 = tpu.matmul %0, %2, %cst {dimension_numbers = #tpu.dot_dimension_numbers<[1], [0], [0], [1], [0, 0, 1, 1], [], []>} : vector<128x128xf32>, vector<128x256xf32>, vector<128x256xf32> -> vector<128x256xf32>
    %cst_3 = arith.constant dense<0.000000e+00> : vector<256xf32>
    %4 = vector.multi_reduction <add>, %3, %cst_3 [0] : vector<128x256xf32> to vector<256xf32>
    %5 = vector.shape_cast %4 : vector<256xf32> to vector<1x256xf32>
    %cst_4 = arith.constant 1.280000e+02 : f32
    %6 = vector.broadcast %cst_4 : f32 to vector<1x256xf32>
    %7 = arith.divf %5, %6 : vector<1x256xf32>
    %8 = arith.mulf %3, %3 : vector<128x256xf32>
    %cst_5 = arith.constant dense<0.000000e+00> : vector<256xf32>
    %9 = vector.multi_reduction <add>, %8, %cst_5 [0] : vector<128x256xf32> to vector<256xf32>
    %10 = vector.shape_cast %9 : vector<256xf32> to vector<1x256xf32>
    %cst_6 = arith.constant 1.280000e+02 : f32
    %11 = vector.broadcast %cst_6 : f32 to vector<1x256xf32>
    %12 = arith.divf %10, %11 : vector<1x256xf32>
    %13 = arith.mulf %7, %7 : vector<1x256xf32>
    %14 = arith.subf %12, %13 : vector<1x256xf32>
    %c0_7 = arith.constant 0 : index
    %c0_8 = arith.constant 0 : index
    %15 = vector.load %arg2[%c0_7, %c0_8] : memref<1x256xf32, #tpu.memory_space<vmem>>, vector<1x256xf32>
    %cst_9 = arith.constant 9.99999974E-6 : f32
    %16 = vector.broadcast %cst_9 : f32 to vector<1x256xf32>
    %17 = arith.addf %14, %16 : vector<1x256xf32>
    %18 = math.rsqrt %17 : vector<1x256xf32>
    %19 = arith.mulf %15, %18 : vector<1x256xf32>
    %c0_10 = arith.constant 0 : index
    %c0_11 = arith.constant 0 : index
    %20 = vector.load %arg3[%c0_10, %c0_11] : memref<1x256xf32, #tpu.memory_space<vmem>>, vector<1x256xf32>
    %21 = arith.mulf %7, %19 : vector<1x256xf32>
    %22 = arith.subf %20, %21 : vector<1x256xf32>
    %23 = vector.broadcast %19 : vector<1x256xf32> to vector<128x256xf32>
    %24 = arith.mulf %3, %23 : vector<128x256xf32>
    %25 = vector.broadcast %22 : vector<1x256xf32> to vector<128x256xf32>
    %26 = arith.addf %24, %25 : vector<128x256xf32>
    %cst_12 = arith.constant 0.000000e+00 : f32
    %27 = vector.broadcast %cst_12 : f32 to vector<128x256xf32>
    %28 = arith.maximumf %26, %27 : vector<128x256xf32>
    %c0_13 = arith.constant 0 : index
    %c0_14 = arith.constant 0 : index
    %29 = vector.load %arg4[%c0_13, %c0_14] : memref<256x128xbf16, #tpu.memory_space<vmem>>, vector<256x128xbf16>
    %30 = arith.extf %29 : vector<256x128xbf16> to vector<256x128xf32>
    %cst_15 = arith.constant dense<0.000000e+00> : vector<128x128xf32>
    %31 = tpu.matmul %28, %30, %cst_15 {dimension_numbers = #tpu.dot_dimension_numbers<[1], [0], [0], [1], [0, 0, 1, 1], [], []>} : vector<128x256xf32>, vector<256x128xf32>, vector<128x128xf32> -> vector<128x128xf32>
    %c0_16 = arith.constant 0 : index
    %c0_17 = arith.constant 0 : index
    %32 = vector.load %arg5[%c0_16, %c0_17] : memref<1x128xf32, #tpu.memory_space<vmem>>, vector<1x128xf32>
    %33 = vector.broadcast %32 : vector<1x128xf32> to vector<128x128xf32>
    %34 = arith.addf %31, %33 : vector<128x128xf32>
    %35 = arith.addf %34, %0 : vector<128x128xf32>
    %c0_18 = arith.constant 0 : index
    %c0_19 = arith.constant 0 : index
    %36 = vector.load %arg6[%c0_18, %c0_19] : memref<128x128xf32, #tpu.memory_space<vmem>>, vector<128x128xf32>
    tpu.vector_store %arg6[%c0_18, %c0_19], %35 {strides = array<i32>} : memref<128x128xf32, #tpu.memory_space<vmem>>, vector<128x128xf32>,
    return
  }
}

</mosaic_0001>

<llo_original>
// kernel: res_mlp_forward.1
$region0: #{res_mlp_forward.1}
  #allocation0 [shape = 'u32[]', space=smem, size = 0x4, offset = 0x4, fixed_abs, tag = 'smem constant byte address 0x4 - core index']
  #allocation1 [shape = 'u32[72,128]{1,0:T(1,128)}', space=vmem, size = 0x9000, scoped, tag = 'internal scratch']
  %s0 = inlined_call_operand.hbm [shape: f32[128,128], index: 0, kind: input, shape index: {}]
  %s1 = inlined_call_operand.hbm [shape: bf16[128,256], index: 1, kind: input, shape index: {}]
  %s2 = inlined_call_operand.hbm [shape: f32[1,256], index: 2, kind: input, shape index: {}]
  %s3 = inlined_call_operand.vmem [shape: f32[1,256], index: 3, kind: input, shape index: {}]
  %s4 = inlined_call_operand.hbm [shape: bf16[256,128], index: 4, kind: input, shape index: {}]
  %s5 = inlined_call_operand.vmem [shape: f32[1,128], index: 5, kind: input, shape index: {}]
  %s6 = inlined_call_operand.hbm [shape: f32[128,128], index: 6, kind: output, shape index: {}]
  %s7 = sld [smem:[#allocation0]]
  $region50: #{res_mlp_forward.1} parent=0
    _
  %s9 = ssub.s32 1, %s7
  %s10 = scalar_select 0, %s9, %s7
  $region1: #{res_mlp_forward.1} parent=0
    #allocation2 [shape = 'u8[65536]{0}', space=vmem, size = 0x10000, scoped, tag = 'input window, operand 0, single buffered']
    #allocation3 [shape = 's32[1]{0}', space=sflag, size = 0x4, scoped, tag = 'scoped memory for res_mlp_forward.1']
    #allocation4 [shape = 's32[1]{0}', space=sflag, size = 0x4, scoped, tag = 'scoped memory for res_mlp_forward.1']
    #allocation5 [shape = 'u8[65536]{0}', space=vmem, size = 0x10000, scoped, tag = 'input window, operand 1, single buffered']
    #allocation6 [shape = 's32[1]{0}', space=sflag, size = 0x4, scoped, tag = 'scoped memory for res_mlp_forward.1']
    #allocation7 [shape = 'u8[1024]{0}', space=vmem, size = 0x400, scoped, tag = 'input window, operand 2, single buffered']
    #allocation8 [shape = 'u8[65536]{0}', space=vmem, size = 0x10000, scoped, tag = 'input window, operand 4, single buffered']
    #allocation9 [shape = 's32[1]{0}', space=sflag, size = 0x4, scoped, tag = 'scoped memory for res_mlp_forward.1']
    #allocation10 [shape = 'u8[65536]{0}', space=vmem, size = 0x10000, scoped, tag = 'output window, operand 0, single buffered']
    %11 = vsyncpa [#allocation3], 0
    %12 = vsyncpa [#allocation6], 0
    %13 = vsyncpa [#allocation9], 0
    %14 = vsyncpa [#allocation4], 0
    // Predicated region
    $region2: #{res_mlp_forward.1} parent=1 // pred_check
      _
    $region3: #{res_mlp_forward.1} parent=1 // pred_check_branch
      %16 = sbr.rel (0) target = $region5
    $region4: #{res_mlp_forward.1} parent=1 // pred_region
      %18 = vsyncadd [#allocation3], 0
      %s19 = sshll.u32 %s0, 4
      %s20 = int_to_ptr.hbm [resolvable:$true] %s19
      %s21 = sshll.u32 [#allocation2], 4
      %s22 = int_to_ptr.vmem [resolvable:$true] %s21
      %27 = dma.hbm_to_vmem [thread:$0]  %s20, 2048, %s22, [#allocation3], 128, 128, 8
    $region5: #{res_mlp_forward.1} parent=1 // pred_fallthru
      _
    // Predicated region
    $region6: #{res_mlp_forward.1} parent=1 // pred_check
      _
    $region7: #{res_mlp_forward.1} parent=1 // pred_check_branch
      %29 = sbr.rel (0) target = $region9
    $region8: #{res_mlp_forward.1} parent=1 // pred_region
      %31 = vsyncadd [#allocation6], 0
      %s32 = sshll.u32 %s1, 4
      %s33 = int_to_ptr.hbm [resolvable:$true] %s32
      %s34 = sshll.u32 [#allocation5], 4
      %s35 = int_to_ptr.vmem [resolvable:$true] %s34
      %40 = dma.hbm_to_vmem [thread:$0]  %s33, 2048, %s35, [#allocation6], 128, 128, 8
    $region9: #{res_mlp_forward.1} parent=1 // pred_fallthru
      _
    // Predicated region
    $region10: #{res_mlp_forward.1} parent=1 // pred_check
      _
    $region11: #{res_mlp_forward.1} parent=1 // pred_check_branch
      %42 = sbr.rel (0) target = $region13
    $region12: #{res_mlp_forward.1} parent=1 // pred_region
      %44 = vsyncadd [#allocation6], 0
      %s46 = sshll.u32 %s2, 4
      %s47 = int_to_ptr.hbm [resolvable:$true] %s46
      %s48 = sshll.u32 [#allocation7], 4
      %s49 = int_to_ptr.vmem [resolvable:$true] %s48
      %51 = dma.hbm_to_vmem [thread:$0]  %s47, 32, %s49, [#allocation6]
    $region13: #{res_mlp_forward.1} parent=1 // pred_fallthru
      _
    // Predicated region
    $region14: #{res_mlp_forward.1} parent=1 // pred_check
      _
    $region15: #{res_mlp_forward.1} parent=1 // pred_check_branch
      %53 = sbr.rel (0) target = $region17
    $region16: #{res_mlp_forward.1} parent=1 // pred_region
      _
    $region17: #{res_mlp_forward.1} parent=1 // pred_fallthru
      _
    // Predicated region
    $region18: #{res_mlp_forward.1} parent=1 // pred_check
      _
    $region19: #{res_mlp_forward.1} parent=1 // pred_check_branch
      %55 = sbr.rel (0) target = $region21
    $region20: #{res_mlp_forward.1} parent=1 // pred_region
      %57 = vsyncadd [#allocation9], 0
      %s58 = sshll.u32 %s4, 4
      %s59 = int_to_ptr.hbm [resolvable:$true] %s58
      %s60 = sshll.u32 [#allocation8], 4
      %s61 = int_to_ptr.vmem [resolvable:$true] %s60
      %66 = dma.hbm_to_vmem [thread:$0]  %s59, 2048, %s61, [#allocation9], 64, 64, 4
    $region21: #{res_mlp_forward.1} parent=1 // pred_fallthru
      _
    // Predicated region
    $region22: #{res_mlp_forward.1} parent=1 // pred_check
      _
    $region23: #{res_mlp_forward.1} parent=1 // pred_check_branch
      %68 = sbr.rel (0) target = $region25
    $region24: #{res_mlp_forward.1} parent=1 // pred_region
      _
    $region25: #{res_mlp_forward.1} parent=1 // pred_fallthru
      _
    // Predicated region
    $region26: #{res_mlp_forward.1} parent=1 // pred_check
      _
    $region27: #{res_mlp_forward.1} parent=1 // pred_check_branch
      %70 = sbr.rel (0) target = $region29
    $region28: #{res_mlp_forward.1} parent=1 // pred_region
      %72 = dma.done [#allocation3], 2048
    $region29: #{res_mlp_forward.1} parent=1 // pred_fallthru
      _
    // Predicated region
    $region30: #{res_mlp_forward.1} parent=1 // pred_check
      _
    $region31: #{res_mlp_forward.1} parent=1 // pred_check_branch
      %74 = sbr.rel (0) target = $region33
    $region32: #{res_mlp_forward.1} parent=1 // pred_region
      %76 = dma.done [#allocation6], 2048
    $region33: #{res_mlp_forward.1} parent=1 // pred_fallthru
      _
    // Predicated region
    $region34: #{res_mlp_forward.1} parent=1 // pred_check
      _
    $region35: #{res_mlp_forward.1} parent=1 // pred_check_branch
      %78 = sbr.rel (0) target = $region37
    $region36: #{res_mlp_forward.1} parent=1 // pred_region
      %80 = dma.done [#allocation6], 32
    $region37: #{res_mlp_forward.1} parent=1 // pred_fallthru
      _
    // Predicated region
    $region38: #{res_mlp_forward.1} parent=1 // pred_check
      _
    $region39: #{res_mlp_forward.1} parent=1 // pred_check_branch
      %82 = sbr.rel (0) target = $region41
    $region40: #{res_mlp_forward.1} parent=1 // pred_region
      %84 = dma.done [#allocation9], 2048
    $region41: #{res_mlp_forward.1} parent=1 // pred_fallthru
      _
    %v85 = vld [vmem:[#allocation2] sm:$0xff]
    %v86 = vld [vmem:[#allocation2 + $0x8] sm:$0xff]
    %v87 = vld [vmem:[#allocation2 + $0x10] sm:$0xff]
    %v88 = vld [vmem:[#allocation2 + $0x18] sm:$0xff]
    %v89 = vld [vmem:[#allocation2 + $0x20] sm:$0xff]
    %v90 = vld [vmem:[#allocation2 + $0x28] sm:$0xff]
    %v91 = vld [vmem:[#allocation2 + $0x30] sm:$0xff]
    %v92 = vld [vmem:[#allocation2 + $0x38] sm:$0xff]
    %v93 = vld [vmem:[#allocation2 + $0x40] sm:$0xff]
    %v94 = vld [vmem:[#allocation2 + $0x48] sm:$0xff]
    %v95 = vld [vmem:[#allocation2 + $0x50] sm:$0xff]
    %v96 = vld [vmem:[#allocation2 + $0x58] sm:$0xff]
    %v97 = vld [vmem:[#allocation2 + $0x60] sm:$0xff]
    %v98 = vld [vmem:[#allocation2 + $0x68] sm:$0xff]
    %v99 = vld [vmem:[#allocation2 + $0x70] sm:$0xff]
    %v100 = vld [vmem:[#allocation2 + $0x78] sm:$0xff]
    %v101 = vld [vmem:[#allocation5] sm:$0xff]
    %v102 = vld [vmem:[#allocation5 + $0x8] sm:$0xff]
    %v103 = vld [vmem:[#allocation5 + $0x10] sm:$0xff]
    %v104 = vld [vmem:[#allocation5 + $0x18] sm:$0xff]
    %v105 = vld [vmem:[#allocation5 + $0x20] sm:$0xff]
    %v106 = vld [vmem:[#allocation5 + $0x28] sm:$0xff]
    %v107 = vld [vmem:[#allocation5 + $0x30] sm:$0xff]
    %v108 = vld [vmem:[#allocation5 + $0x38] sm:$0xff]
    %v109 = vld [vmem:[#allocation5 + $0x40] sm:$0xff]
    %v110 = vld [vmem:[#allocation5 + $0x48] sm:$0xff]
    %v111 = vld [vmem:[#allocation5 + $0x50] sm:$0xff]
    %v112 = vld [vmem:[#allocation5 + $0x58] sm:$0xff]
    %v113 = vld [vmem:[#allocation5 + $0x60] sm:$0xff]
    %v114 = vld [vmem:[#allocation5 + $0x68] sm:$0xff]
    %v115 = vld [vmem:[#allocation5 + $0x70] sm:$0xff]
    %v116 = vld [vmem:[#allocation5 + $0x78] sm:$0xff]
    %v117 = vunpack.c.l.bf16 %v101
    %v118 = vunpack.c.h.bf16 %v101
    %v119 = vunpack.c.l.bf16 %v102
    %v120 = vunpack.c.h.bf16 %v102
    %v121 = vunpack.c.l.bf16 %v103
    %v122 = vunpack.c.h.bf16 %v103
    %v123 = vunpack.c.l.bf16 %v104
    %v124 = vunpack.c.h.bf16 %v104
    %v125 = vunpack.c.l.bf16 %v105
    %v126 = vunpack.c.h.bf16 %v105
    %v127 = vunpack.c.l.bf16 %v106
    %v128 = vunpack.c.h.bf16 %v106
    %v129 = vunpack.c.l.bf16 %v107
    %v130 = vunpack.c.h.bf16 %v107
    %v131 = vunpack.c.l.bf16 %v108
    %v132 = vunpack.c.h.bf16 %v108
    %v133 = vunpack.c.l.bf16 %v109
    %v134 = vunpack.c.h.bf16 %v109
    %v135 = vunpack.c.l.bf16 %v110
    %v136 = vunpack.c.h.bf16 %v110
    %v137 = vunpack.c.l.bf16 %v111
    %v138 = vunpack.c.h.bf16 %v111
    %v139 = vunpack.c.l.bf16 %v112
    %v140 = vunpack.c.h.bf16 %v112
    %v141 = vunpack.c.l.bf16 %v113
    %v142 = vunpack.c.h.bf16 %v113
    %v143 = vunpack.c.l.bf16 %v114
    %v144 = vunpack.c.h.bf16 %v114
    %v145 = vunpack.c.l.bf16 %v115
    %v146 = vunpack.c.h.bf16 %v115
    %v147 = vunpack.c.l.bf16 %v116
    %v148 = vunpack.c.h.bf16 %v116
    %149 = vmatpush.msra.mxu0 %v147
    %150 = vmatpush.msra.mxu0 %v145
    %151 = vmatpush.msra.mxu0 %v143
    %152 = vmatpush.msra.mxu0 %v141
    %153 = vmatpush.msra.mxu0 %v139
    %154 = vmatpush.msra.mxu0 %v137
    %155 = vmatpush.msra.mxu0 %v135
    %156 = vmatpush.msra.mxu0 %v133
    %157 = vmatpush.msra.mxu0 %v131
    %158 = vmatpush.msra.mxu0 %v129
    %159 = vmatpush.msra.mxu0 %v127
    %160 = vmatpush.msra.mxu0 %v125
    %161 = vmatpush.msra.mxu0 %v123
    %162 = vmatpush.msra.mxu0 %v121
    %163 = vmatpush.msra.mxu0 %v119
    %164 = vmatpush.msra.mxu0 %v117
    %165 = vmatmul.f32.gmra.mxu0 %v85
    %v166 = vpop.f32.mrf.mxu0
    %v167 = vadd.f32 0.0, %v166
    %168 = vmatmul.f32.gmra.mxu0 %v86
    %v169 = vpop.f32.mrf.mxu0
    %v170 = vadd.f32 0.0, %v169
    %171 = vmatmul.f32.gmra.mxu0 %v87
    %v172 = vpop.f32.mrf.mxu0
    %v173 = vadd.f32 0.0, %v172
    %174 = vmatmul.f32.gmra.mxu0 %v88
    %v175 = vpop.f32.mrf.mxu0
    %v176 = vadd.f32 0.0, %v175
    %177 = vmatmul.f32.gmra.mxu0 %v89
    %v178 = vpop.f32.mrf.mxu0
    %v179 = vadd.f32 0.0, %v178
    %180 = vmatmul.f32.gmra.mxu0 %v90
    %v181 = vpop.f32.mrf.mxu0
    %v182 = vadd.f32 0.0, %v181
    %183 = vmatmul.f32.gmra.mxu0 %v91
    %v184 = vpop.f32.mrf.mxu0
    %v185 = vadd.f32 0.0, %v184
    %186 = vmatmul.f32.gmra.mxu0 %v92
    %v187 = vpop.f32.mrf.mxu0
    %v188 = vadd.f32 0.0, %v187
    %189 = vmatmul.f32.gmra.mxu0 %v93
    %v190 = vpop.f32.mrf.mxu0
    %v191 = vadd.f32 0.0, %v190
    %192 = vmatmul.f32.gmra.mxu0 %v94
    %v193 = vpop.f32.mrf.mxu0
    %v194 = vadd.f32 0.0, %v193
    %195 = vmatmul.f32.gmra.mxu0 %v95
    %v196 = vpop.f32.mrf.mxu0
    %v197 = vadd.f32 0.0, %v196
    %198 = vmatmul.f32.gmra.mxu0 %v96
    %v199 = vpop.f32.mrf.mxu0
    %v200 = vadd.f32 0.0, %v199
    %201 = vmatmul.f32.gmra.mxu0 %v97
    %v202 = vpop.f32.mrf.mxu0
    %v203 = vadd.f32 0.0, %v202
    %204 = vmatmul.f32.gmra.mxu0 %v98
    %v205 = vpop.f32.mrf.mxu0
    %v206 = vadd.f32 0.0, %v205
    %207 = vmatmul.f32.gmra.mxu0 %v99
    %v208 = vpop.f32.mrf.mxu0
    %v209 = vadd.f32 0.0, %v208
    %210 = vmatmul.f32.gmra.mxu0 %v100
    %v211 = vpop.f32.mrf.mxu0
    %v212 = vadd.f32 0.0, %v211
    %213 = vdwg.mxu0
    %214 = vmatpush.msra.mxu0 %v148
    %215 = vmatpush.msra.mxu0 %v146
    %216 = vmatpush.msra.mxu0 %v144
    %217 = vmatpush.msra.mxu0 %v142
    %218 = vmatpush.msra.mxu0 %v140
    %219 = vmatpush.msra.mxu0 %v138
    %220 = vmatpush.msra.mxu0 %v136
    %221 = vmatpush.msra.mxu0 %v134
    %222 = vmatpush.msra.mxu0 %v132
    %223 = vmatpush.msra.mxu0 %v130
    %224 = vmatpush.msra.mxu0 %v128
    %225 = vmatpush.msra.mxu0 %v126
    %226 = vmatpush.msra.mxu0 %v124
    %227 = vmatpush.msra.mxu0 %v122
    %228 = vmatpush.msra.mxu0 %v120
    %229 = vmatpush.msra.mxu0 %v118
    %230 = vmatmul.f32.gmra.mxu0 %v85
    %v231 = vpop.f32.mrf.mxu0
    %v232 = vadd.f32 0.0, %v231
    %233 = vmatmul.f32.gmra.mxu0 %v86
    %v234 = vpop.f32.mrf.mxu0
    %v235 = vadd.f32 0.0, %v234
    %236 = vmatmul.f32.gmra.mxu0 %v87
    %v237 = vpop.f32.mrf.mxu0
    %v238 = vadd.f32 0.0, %v237
    %239 = vmatmul.f32.gmra.mxu0 %v88
    %v240 = vpop.f32.mrf.mxu0
    %v241 = vadd.f32 0.0, %v240
    %242 = vmatmul.f32.gmra.mxu0 %v89
    %v243 = vpop.f32.mrf.mxu0
    %v244 = vadd.f32 0.0, %v243
    %245 = vmatmul.f32.gmra.mxu0 %v90
    %v246 = vpop.f32.mrf.mxu0
    %v247 = vadd.f32 0.0, %v246
    %248 = vmatmul.f32.gmra.mxu0 %v91
    %v249 = vpop.f32.mrf.mxu0
    %v250 = vadd.f32 0.0, %v249
    %251 = vmatmul.f32.gmra.mxu0 %v92
    %v252 = vpop.f32.mrf.mxu0
    %v253 = vadd.f32 0.0, %v252
    %254 = vmatmul.f32.gmra.mxu0 %v93
    %v255 = vpop.f32.mrf.mxu0
    %v256 = vadd.f32 0.0, %v255
    %257 = vmatmul.f32.gmra.mxu0 %v94
    %v258 = vpop.f32.mrf.mxu0
    %v259 = vadd.f32 0.0, %v258
    %260 = vmatmul.f32.gmra.mxu0 %v95
    %v261 = vpop.f32.mrf.mxu0
    %v262 = vadd.f32 0.0, %v261
    %263 = vmatmul.f32.gmra.mxu0 %v96
    %v264 = vpop.f32.mrf.mxu0
    %v265 = vadd.f32 0.0, %v264
    %266 = vmatmul.f32.gmra.mxu0 %v97
    %v267 = vpop.f32.mrf.mxu0
    %v268 = vadd.f32 0.0, %v267
    %269 = vmatmul.f32.gmra.mxu0 %v98
    %v270 = vpop.f32.mrf.mxu0
    %v271 = vadd.f32 0.0, %v270
    %272 = vmatmul.f32.gmra.mxu0 %v99
    %v273 = vpop.f32.mrf.mxu0
    %v274 = vadd.f32 0.0, %v273
    %275 = vmatmul.f32.gmra.mxu0 %v100
    %v276 = vpop.f32.mrf.mxu0
    %v277 = vadd.f32 0.0, %v276
    %278 = vdwg.mxu0
    %v279 = vadd.f32 %v167, %v170
    %v280 = vadd.f32 %v279, %v173
    %v281 = vadd.f32 %v280, %v176
    %v282 = vadd.f32 %v281, %v179
    %v283 = vadd.f32 %v282, %v182
    %v284 = vadd.f32 %v283, %v185
    %v285 = vadd.f32 %v284, %v188
    %v286 = vadd.f32 %v285, %v191
    %v287 = vadd.f32 %v286, %v194
    %v288 = vadd.f32 %v287, %v197
    %v289 = vadd.f32 %v288, %v200
    %v290 = vadd.f32 %v289, %v203
    %v291 = vadd.f32 %v290, %v206
    %v292 = vadd.f32 %v291, %v209
    %v293 = vadd.f32 %v292, %v212
    %v294 = vrot.slane %v293, 4
    %v295 = vadd.f32 %v293, %v294
    %v296 = vrot.slane %v295, 2
    %v297 = vadd.f32 %v295, %v296
    %v298 = vrot.slane %v297, 1
    %v299 = vadd.f32 %v297, %v298
    %v300 = vadd.f32 %v232, %v235
    %v301 = vadd.f32 %v300, %v238
    %v302 = vadd.f32 %v301, %v241
    %v303 = vadd.f32 %v302, %v244
    %v304 = vadd.f32 %v303, %v247
    %v305 = vadd.f32 %v304, %v250
    %v306 = vadd.f32 %v305, %v253
    %v307 = vadd.f32 %v306, %v256
    %v308 = vadd.f32 %v307, %v259
    %v309 = vadd.f32 %v308, %v262
    %v310 = vadd.f32 %v309, %v265
    %v311 = vadd.f32 %v310, %v268
    %v312 = vadd.f32 %v311, %v271
    %v313 = vadd.f32 %v312, %v274
    %v314 = vadd.f32 %v313, %v277
    %v315 = vrot.slane %v314, 4
    %v316 = vadd.f32 %v314, %v315
    %v317 = vrot.slane %v316, 2
    %v318 = vadd.f32 %v316, %v317
    %v319 = vrot.slane %v318, 1
    %v320 = vadd.f32 %v318, %v319
    %v321 = vrcp.pop 128.0
    %v322 = vmul.f32 128.0, %v321
    %v323 = vsub.f32 1.0, %v322
    %v324 = vmul.f32 %v321, %v323
    %v325 = vadd.f32 %v321, %v324
    %vm326 = vweird.f32 %v321
    %v327 = vsel %vm326, %v321, %v325
    %v328 = vmul.f32 %v299, %v327
    %v329 = vmul.f32 %v320, %v327
    %v330 = vmul.f32 %v167, %v167
    %v331 = vmul.f32 %v232, %v232
    %v332 = vmul.f32 %v170, %v170
    %v333 = vmul.f32 %v235, %v235
    %v334 = vmul.f32 %v173, %v173
    %v335 = vmul.f32 %v238, %v238
    %v336 = vmul.f32 %v176, %v176
    %v337 = vmul.f32 %v241, %v241
    %v338 = vmul.f32 %v179, %v179
    %v339 = vmul.f32 %v244, %v244
    %v340 = vmul.f32 %v182, %v182
    %v341 = vmul.f32 %v247, %v247
    %v342 = vmul.f32 %v185, %v185
    %v343 = vmul.f32 %v250, %v250
    %v344 = vmul.f32 %v188, %v188
    %v345 = vmul.f32 %v253, %v253
    %v346 = vmul.f32 %v191, %v191
    %v347 = vmul.f32 %v256, %v256
    %v348 = vmul.f32 %v194, %v194
    %v349 = vmul.f32 %v259, %v259
    %v350 = vmul.f32 %v197, %v197
    %v351 = vmul.f32 %v262, %v262
    %v352 = vmul.f32 %v200, %v200
    %v353 = vmul.f32 %v265, %v265
    %v354 = vmul.f32 %v203, %v203
    %v355 = vmul.f32 %v268, %v268
    %v356 = vmul.f32 %v206, %v206
    %v357 = vmul.f32 %v271, %v271
    %v358 = vmul.f32 %v209, %v209
    %v359 = vmul.f32 %v274, %v274
    %v360 = vmul.f32 %v212, %v212
    %v361 = vmul.f32 %v277, %v277
    %v362 = vadd.f32 %v330, %v332
    %v363 = vadd.f32 %v362, %v334
    %v364 = vadd.f32 %v363, %v336
    %v365 = vadd.f32 %v364, %v338
    %v366 = vadd.f32 %v365, %v340
    %v367 = vadd.f32 %v366, %v342
    %v368 = vadd.f32 %v367, %v344
    %v369 = vadd.f32 %v368, %v346
    %v370 = vadd.f32 %v369, %v348
    %v371 = vadd.f32 %v370, %v350
    %v372 = vadd.f32 %v371, %v352
    %v373 = vadd.f32 %v372, %v354
    %v374 = vadd.f32 %v373, %v356
    %v375 = vadd.f32 %v374, %v358
    %v376 = vadd.f32 %v375, %v360
    %v377 = vrot.slane %v376, 4
    %v378 = vadd.f32 %v376, %v377
    %v379 = vrot.slane %v378, 2
    %v380 = vadd.f32 %v378, %v379
    %v381 = vrot.slane %v380, 1
    %v382 = vadd.f32 %v380, %v381
    %v383 = vadd.f32 %v331, %v333
    %v384 = vadd.f32 %v383, %v335
    %v385 = vadd.f32 %v384, %v337
    %v386 = vadd.f32 %v385, %v339
    %v387 = vadd.f32 %v386, %v341
    %v388 = vadd.f32 %v387, %v343
    %v389 = vadd.f32 %v388, %v345
    %v390 = vadd.f32 %v389, %v347
    %v391 = vadd.f32 %v390, %v349
    %v392 = vadd.f32 %v391, %v351
    %v393 = vadd.f32 %v392, %v353
    %v394 = vadd.f32 %v393, %v355
    %v395 = vadd.f32 %v394, %v357
    %v396 = vadd.f32 %v395, %v359
    %v397 = vadd.f32 %v396, %v361
    %v398 = vrot.slane %v397, 4
    %v399 = vadd.f32 %v397, %v398
    %v400 = vrot.slane %v399, 2
    %v401 = vadd.f32 %v399, %v400
    %v402 = vrot.slane %v401, 1
    %v403 = vadd.f32 %v401, %v402
    %v404 = vmul.f32 %v382, %v327
    %v405 = vmul.f32 %v403, %v327
    %v406 = vmul.f32 %v328, %v328
    %v407 = vmul.f32 %v329, %v329
    %v408 = vsub.f32 %v404, %v406
    %v409 = vsub.f32 %v405, %v407
    %v410 = vld [vmem:[#allocation7] sm:$0x3]
    %v411 = vadd.f32 %v408, 1e-05
    %v412 = vadd.f32 %v409, 1e-05
    %v413 = vrsqrt.pop %v411
    %v414 = vmul.f32 %v413, %v411
    %v415 = vmul.f32 %v414, %v413
    %v416 = vmul.f32 0.5, %v415
    %v417 = vsub.f32 1.5, %v416
    %v418 = vmul.f32 %v413, %v417
    %vm419 = vweird.f32 %v411
    %vm420 = vweird.f32 %v413
    %vm421 = vmor %vm419, %vm420
    %v422 = vsel %vm421, %v413, %v418
    %v423 = vrsqrt.pop %v412
    %v424 = vmul.f32 %v423, %v412
    %v425 = vmul.f32 %v424, %v423
    %v426 = vmul.f32 0.5, %v425
    %v427 = vsub.f32 1.5, %v426
    %v428 = vmul.f32 %v423, %v427
    %vm429 = vweird.f32 %v412
    %vm430 = vweird.f32 %v423
    %vm431 = vmor %vm429, %vm430
    %v432 = vsel %vm431, %v423, %v428
    %v435 = vrot.slane %v432, 7
    %vm436 = vcmask 1040384
    %v437 = vsel %vm436, %v422, %v435
    %v439 = vmul.f32 %v410, %v437
    %v440 = vld [vmem:[%s3] sm:$0x3]
    %v442 = vperm.slane %v439, 0
    %v443 = vperm.slane %v439, 1
    %v446 = vmul.f32 %v328, %v442
    %v447 = vmul.f32 %v329, %v443
    %v450 = vrot.slane %v447, 7
    %v451 = vsel %vm436, %v446, %v450
    %v453 = vsub.f32 %v440, %v451
    %v454 = vmul.f32 %v167, %v442
    %v455 = vmul.f32 %v232, %v443
    %v456 = vmul.f32 %v170, %v442
    %v457 = vmul.f32 %v235, %v443
    %v458 = vmul.f32 %v173, %v442
    %v459 = vmul.f32 %v238, %v443
    %v460 = vmul.f32 %v176, %v442
    %v461 = vmul.f32 %v241, %v443
    %v462 = vmul.f32 %v179, %v442
    %v463 = vmul.f32 %v244, %v443
    %v464 = vmul.f32 %v182, %v442
    %v465 = vmul.f32 %v247, %v443
    %v466 = vmul.f32 %v185, %v442
    %v467 = vmul.f32 %v250, %v443
    %v468 = vmul.f32 %v188, %v442
    %v469 = vmul.f32 %v253, %v443
    %v470 = vmul.f32 %v191, %v442
    %v471 = vmul.f32 %v256, %v443
    %v472 = vmul.f32 %v194, %v442
    %v473 = vmul.f32 %v259, %v443
    %v474 = vmul.f32 %v197, %v442
    %v475 = vmul.f32 %v262, %v443
    %v476 = vmul.f32 %v200, %v442
    %v477 = vmul.f32 %v265, %v443
    %v478 = vmul.f32 %v203, %v442
    %v479 = vmul.f32 %v268, %v443
    %v480 = vmul.f32 %v206, %v442
    %v481 = vmul.f32 %v271, %v443
    %v482 = vmul.f32 %v209, %v442
    %v483 = vmul.f32 %v274, %v443
    %v484 = vmul.f32 %v212, %v442
    %v485 = vmul.f32 %v277, %v443
    %v487 = vperm.slane %v453, 0
    %v488 = vperm.slane %v453, 1
    %v491 = vadd.f32 %v454, %v487
    %v492 = vadd.f32 %v455, %v488
    %v493 = vadd.f32 %v456, %v487
    %v494 = vadd.f32 %v457, %v488
    %v495 = vadd.f32 %v458, %v487
    %v496 = vadd.f32 %v459, %v488
    %v497 = vadd.f32 %v460, %v487
    %v498 = vadd.f32 %v461, %v488
    %v499 = vadd.f32 %v462, %v487
    %v500 = vadd.f32 %v463, %v488
    %v501 = vadd.f32 %v464, %v487
    %v502 = vadd.f32 %v465, %v488
    %v503 = vadd.f32 %v466, %v487
    %v504 = vadd.f32 %v467, %v488
    %v505 = vadd.f32 %v468, %v487
    %v506 = vadd.f32 %v469, %v488
    %v507 = vadd.f32 %v470, %v487
    %v508 = vadd.f32 %v471, %v488
    %v509 = vadd.f32 %v472, %v487
    %v510 = vadd.f32 %v473, %v488
    %v511 = vadd.f32 %v474, %v487
    %v512 = vadd.f32 %v475, %v488
    %v513 = vadd.f32 %v476, %v487
    %v514 = vadd.f32 %v477, %v488
    %v515 = vadd.f32 %v478, %v487
    %v516 = vadd.f32 %v479, %v488
    %v517 = vadd.f32 %v480, %v487
    %v518 = vadd.f32 %v481, %v488
    %v519 = vadd.f32 %v482, %v487
    %v520 = vadd.f32 %v483, %v488
    %v521 = vadd.f32 %v484, %v487
    %v522 = vadd.f32 %v485, %v488
    %v523 = vmax.f32 %v491, 0.0
    %v524 = vmax.f32 %v492, 0.0
    %v525 = vmax.f32 %v493, 0.0
    %v526 = vmax.f32 %v494, 0.0
    %v527 = vmax.f32 %v495, 0.0
    %v528 = vmax.f32 %v496, 0.0
    %v529 = vmax.f32 %v497, 0.0
    %v530 = vmax.f32 %v498, 0.0
    %v531 = vmax.f32 %v499, 0.0
    %v532 = vmax.f32 %v500, 0.0
    %v533 = vmax.f32 %v501, 0.0
    %v534 = vmax.f32 %v502, 0.0
    %v535 = vmax.f32 %v503, 0.0
    %v536 = vmax.f32 %v504, 0.0
    %v537 = vmax.f32 %v505, 0.0
    %v538 = vmax.f32 %v506, 0.0
    %v539 = vmax.f32 %v507, 0.0
    %v540 = vmax.f32 %v508, 0.0
    %v541 = vmax.f32 %v509, 0.0
    %v542 = vmax.f32 %v510, 0.0
    %v543 = vmax.f32 %v511, 0.0
    %v544 = vmax.f32 %v512, 0.0
    %v545 = vmax.f32 %v513, 0.0
    %v546 = vmax.f32 %v514, 0.0
    %v547 = vmax.f32 %v515, 0.0
    %v548 = vmax.f32 %v516, 0.0
    %v549 = vmax.f32 %v517, 0.0
    %v550 = vmax.f32 %v518, 0.0
    %v551 = vmax.f32 %v519, 0.0
    %v552 = vmax.f32 %v520, 0.0
    %v553 = vmax.f32 %v521, 0.0
    %v554 = vmax.f32 %v522, 0.0
    %v555 = vld [vmem:[#allocation8] sm:$0xf]
    %v556 = vld [vmem:[#allocation8 + $0x4] sm:$0xf]
    %v557 = vld [vmem:[#allocation8 + $0x8] sm:$0xf]
    %v558 = vld [vmem:[#allocation8 + $0xc] sm:$0xf]
    %v559 = vld [vmem:[#allocation8 + $0x10] sm:$0xf]
    %v560 = vld [vmem:[#allocation8 + $0x14] sm:$0xf]
    %v561 = vld [vmem:[#allocation8 + $0x18] sm:$0xf]
    %v562 = vld [vmem:[#allocation8 + $0x1c] sm:$0xf]
    %v563 = vld [vmem:[#allocation8 + $0x20] sm:$0xf]
    %v564 = vld [vmem:[#allocation8 + $0x24] sm:$0xf]
    %v565 = vld [vmem:[#allocation8 + $0x28] sm:$0xf]
    %v566 = vld [vmem:[#allocation8 + $0x2c] sm:$0xf]
    %v567 = vld [vmem:[#allocation8 + $0x30] sm:$0xf]
    %v568 = vld [vmem:[#allocation8 + $0x34] sm:$0xf]
    %v569 = vld [vmem:[#allocation8 + $0x38] sm:$0xf]
    %v570 = vld [vmem:[#allocation8 + $0x3c] sm:$0xf]
    %v571 = vld [vmem:[#allocation8 + $0x40] sm:$0xf]
    %v572 = vld [vmem:[#allocation8 + $0x44] sm:$0xf]
    %v573 = vld [vmem:[#allocation8 + $0x48] sm:$0xf]
    %v574 = vld [vmem:[#allocation8 + $0x4c] sm:$0xf]
    %v575 = vld [vmem:[#allocation8 + $0x50] sm:$0xf]
    %v576 = vld [vmem:[#allocation8 + $0x54] sm:$0xf]
    %v577 = vld [vmem:[#allocation8 + $0x58] sm:$0xf]
    %v578 = vld [vmem:[#allocation8 + $0x5c] sm:$0xf]
    %v579 = vld [vmem:[#allocation8 + $0x60] sm:$0xf]
    %v580 = vld [vmem:[#allocation8 + $0x64] sm:$0xf]
    %v581 = vld [vmem:[#allocation8 + $0x68] sm:$0xf]
    %v582 = vld [vmem:[#allocation8 + $0x6c] sm:$0xf]
    %v583 = vld [vmem:[#allocation8 + $0x70] sm:$0xf]
    %v584 = vld [vmem:[#allocation8 + $0x74] sm:$0xf]
    %v585 = vld [vmem:[#allocation8 + $0x78] sm:$0xf]
    %v586 = vld [vmem:[#allocation8 + $0x7c] sm:$0xf]
    %v587 = vunpack.c.l.bf16 %v555
    %v588 = vunpack.c.l.bf16 %v556
    %v589 = vunpack.c.l.bf16 %v557
    %v590 = vunpack.c.l.bf16 %v558
    %v591 = vunpack.c.l.bf16 %v559
    %v592 = vunpack.c.l.bf16 %v560
    %v593 = vunpack.c.l.bf16 %v561
    %v594 = vunpack.c.l.bf16 %v562
    %v595 = vunpack.c.l.bf16 %v563
    %v596 = vunpack.c.l.bf16 %v564
    %v597 = vunpack.c.l.bf16 %v565
    %v598 = vunpack.c.l.bf16 %v566
    %v599 = vunpack.c.l.bf16 %v567
    %v600 = vunpack.c.l.bf16 %v568
    %v601 = vunpack.c.l.bf16 %v569
    %v602 = vunpack.c.l.bf16 %v570
    %v603 = vunpack.c.l.bf16 %v571
    %v604 = vunpack.c.l.bf16 %v572
    %v605 = vunpack.c.l.bf16 %v573
    %v606 = vunpack.c.l.bf16 %v574
    %v607 = vunpack.c.l.bf16 %v575
    %v608 = vunpack.c.l.bf16 %v576
    %v609 = vunpack.c.l.bf16 %v577
    %v610 = vunpack.c.l.bf16 %v578
    %v611 = vunpack.c.l.bf16 %v579
    %v612 = vunpack.c.l.bf16 %v580
    %v613 = vunpack.c.l.bf16 %v581
    %v614 = vunpack.c.l.bf16 %v582
    %v615 = vunpack.c.l.bf16 %v583
    %v616 = vunpack.c.l.bf16 %v584
    %v617 = vunpack.c.l.bf16 %v585
    %v618 = vunpack.c.l.bf16 %v586
    %v619 = vld [vmem:[%s5] sm:$0x1]
    %v621 = vperm.slane %v619, 0
    %623 = vmatpush.msra.mxu0 %v602
    %624 = vmatpush.msra.mxu0 %v601
    %625 = vmatpush.msra.mxu0 %v600
    %626 = vmatpush.msra.mxu0 %v599
    %627 = vmatpush.msra.mxu0 %v598
    %628 = vmatpush.msra.mxu0 %v597
    %629 = vmatpush.msra.mxu0 %v596
    %630 = vmatpush.msra.mxu0 %v595
    %631 = vmatpush.msra.mxu0 %v594
    %632 = vmatpush.msra.mxu0 %v593
    %633 = vmatpush.msra.mxu0 %v592
    %634 = vmatpush.msra.mxu0 %v591
    %635 = vmatpush.msra.mxu0 %v590
    %636 = vmatpush.msra.mxu0 %v589
    %637 = vmatpush.msra.mxu0 %v588
    %638 = vmatpush.msra.mxu0 %v587
    %639 = vmatmul.f32.gmra.mxu0 %v523
    %v640 = vpop.f32.mrf.mxu0
    %v641 = vadd.f32 %v621, %v640
    %642 = vmatmul.f32.gmra.mxu0 %v525
    %v643 = vpop.f32.mrf.mxu0
    %v644 = vadd.f32 %v621, %v643
    %645 = vmatmul.f32.gmra.mxu0 %v527
    %v646 = vpop.f32.mrf.mxu0
    %v647 = vadd.f32 %v621, %v646
    %648 = vmatmul.f32.gmra.mxu0 %v529
    %v649 = vpop.f32.mrf.mxu0
    %v650 = vadd.f32 %v621, %v649
    %651 = vmatmul.f32.gmra.mxu0 %v531
    %v652 = vpop.f32.mrf.mxu0
    %v653 = vadd.f32 %v621, %v652
    %654 = vmatmul.f32.gmra.mxu0 %v533
    %v655 = vpop.f32.mrf.mxu0
    %v656 = vadd.f32 %v621, %v655
    %657 = vmatmul.f32.gmra.mxu0 %v535
    %v658 = vpop.f32.mrf.mxu0
    %v659 = vadd.f32 %v621, %v658
    %660 = vmatmul.f32.gmra.mxu0 %v537
    %v661 = vpop.f32.mrf.mxu0
    %v662 = vadd.f32 %v621, %v661
    %663 = vmatmul.f32.gmra.mxu0 %v539
    %v664 = vpop.f32.mrf.mxu0
    %v665 = vadd.f32 %v621, %v664
    %666 = vmatmul.f32.gmra.mxu0 %v541
    %v667 = vpop.f32.mrf.mxu0
    %v668 = vadd.f32 %v621, %v667
    %669 = vmatmul.f32.gmra.mxu0 %v543
    %v670 = vpop.f32.mrf.mxu0
    %v671 = vadd.f32 %v621, %v670
    %672 = vmatmul.f32.gmra.mxu0 %v545
    %v673 = vpop.f32.mrf.mxu0
    %v674 = vadd.f32 %v621, %v673
    %675 = vmatmul.f32.gmra.mxu0 %v547
    %v676 = vpop.f32.mrf.mxu0
    %v677 = vadd.f32 %v621, %v676
    %678 = vmatmul.f32.gmra.mxu0 %v549
    %v679 = vpop.f32.mrf.mxu0
    %v680 = vadd.f32 %v621, %v679
    %681 = vmatmul.f32.gmra.mxu0 %v551
    %v682 = vpop.f32.mrf.mxu0
    %v683 = vadd.f32 %v621, %v682
    %684 = vmatmul.f32.gmra.mxu0 %v553
    %v685 = vpop.f32.mrf.mxu0
    %v686 = vadd.f32 %v621, %v685
    %687 = vdwg.mxu0
    %688 = vmatpush.msra.mxu0 %v618
    %689 = vmatpush.msra.mxu0 %v617
    %690 = vmatpush.msra.mxu0 %v616
    %691 = vmatpush.msra.mxu0 %v615
    %692 = vmatpush.msra.mxu0 %v614
    %693 = vmatpush.msra.mxu0 %v613
    %694 = vmatpush.msra.mxu0 %v612
    %695 = vmatpush.msra.mxu0 %v611
    %696 = vmatpush.msra.mxu0 %v610
    %697 = vmatpush.msra.mxu0 %v609
    %698 = vmatpush.msra.mxu0 %v608
    %699 = vmatpush.msra.mxu0 %v607
    %700 = vmatpush.msra.mxu0 %v606
    %701 = vmatpush.msra.mxu0 %v605
    %702 = vmatpush.msra.mxu0 %v604
    %703 = vmatpush.msra.mxu0 %v603
    %704 = vmatmul.f32.gmra.mxu0 %v524
    %v705 = vpop.f32.mrf.mxu0
    %v706 = vadd.f32 %v641, %v705
    %707 = vmatmul.f32.gmra.mxu0 %v526
    %v708 = vpop.f32.mrf.mxu0
    %v709 = vadd.f32 %v644, %v708
    %710 = vmatmul.f32.gmra.mxu0 %v528
    %v711 = vpop.f32.mrf.mxu0
    %v712 = vadd.f32 %v647, %v711
    %713 = vmatmul.f32.gmra.mxu0 %v530
    %v714 = vpop.f32.mrf.mxu0
    %v715 = vadd.f32 %v650, %v714
    %716 = vmatmul.f32.gmra.mxu0 %v532
    %v717 = vpop.f32.mrf.mxu0
    %v718 = vadd.f32 %v653, %v717
    %719 = vmatmul.f32.gmra.mxu0 %v534
    %v720 = vpop.f32.mrf.mxu0
    %v721 = vadd.f32 %v656, %v720
    %722 = vmatmul.f32.gmra.mxu0 %v536
    %v723 = vpop.f32.mrf.mxu0
    %v724 = vadd.f32 %v659, %v723
    %725 = vmatmul.f32.gmra.mxu0 %v538
    %v726 = vpop.f32.mrf.mxu0
    %v727 = vadd.f32 %v662, %v726
    %728 = vmatmul.f32.gmra.mxu0 %v540
    %v729 = vpop.f32.mrf.mxu0
    %v730 = vadd.f32 %v665, %v729
    %731 = vmatmul.f32.gmra.mxu0 %v542
    %v732 = vpop.f32.mrf.mxu0
    %v733 = vadd.f32 %v668, %v732
    %734 = vmatmul.f32.gmra.mxu0 %v544
    %v735 = vpop.f32.mrf.mxu0
    %v736 = vadd.f32 %v671, %v735
    %737 = vmatmul.f32.gmra.mxu0 %v546
    %v738 = vpop.f32.mrf.mxu0
    %v739 = vadd.f32 %v674, %v738
    %740 = vmatmul.f32.gmra.mxu0 %v548
    %v741 = vpop.f32.mrf.mxu0
    %v742 = vadd.f32 %v677, %v741
    %743 = vmatmul.f32.gmra.mxu0 %v550
    %v744 = vpop.f32.mrf.mxu0
    %v745 = vadd.f32 %v680, %v744
    %746 = vmatmul.f32.gmra.mxu0 %v552
    %v747 = vpop.f32.mrf.mxu0
    %v748 = vadd.f32 %v683, %v747
    %749 = vmatmul.f32.gmra.mxu0 %v554
    %v750 = vpop.f32.mrf.mxu0
    %v751 = vadd.f32 %v686, %v750
    %752 = vdwg.mxu0
    %v753 = vadd.f32 %v706, %v85
    %v754 = vadd.f32 %v709, %v86
    %v755 = vadd.f32 %v712, %v87
    %v756 = vadd.f32 %v715, %v88
    %v757 = vadd.f32 %v718, %v89
    %v758 = vadd.f32 %v721, %v90
    %v759 = vadd.f32 %v724, %v91
    %v760 = vadd.f32 %v727, %v92
    %v761 = vadd.f32 %v730, %v93
    %v762 = vadd.f32 %v733, %v94
    %v763 = vadd.f32 %v736, %v95
    %v764 = vadd.f32 %v739, %v96
    %v765 = vadd.f32 %v742, %v97
    %v766 = vadd.f32 %v745, %v98
    %v767 = vadd.f32 %v748, %v99
    %v768 = vadd.f32 %v751, %v100
    %769 = vst [vmem:[#allocation10] sm:$0xff] %v753
    %770 = vst [vmem:[#allocation10 + $0x8] sm:$0xff] %v754
    %771 = vst [vmem:[#allocation10 + $0x10] sm:$0xff] %v755
    %772 = vst [vmem:[#allocation10 + $0x18] sm:$0xff] %v756
    %773 = vst [vmem:[#allocation10 + $0x20] sm:$0xff] %v757
    %774 = vst [vmem:[#allocation10 + $0x28] sm:$0xff] %v758
    %775 = vst [vmem:[#allocation10 + $0x30] sm:$0xff] %v759
    %776 = vst [vmem:[#allocation10 + $0x38] sm:$0xff] %v760
    %777 = vst [vmem:[#allocation10 + $0x40] sm:$0xff] %v761
    %778 = vst [vmem:[#allocation10 + $0x48] sm:$0xff] %v762
    %779 = vst [vmem:[#allocation10 + $0x50] sm:$0xff] %v763
    %780 = vst [vmem:[#allocation10 + $0x58] sm:$0xff] %v764
    %781 = vst [vmem:[#allocation10 + $0x60] sm:$0xff] %v765
    %782 = vst [vmem:[#allocation10 + $0x68] sm:$0xff] %v766
    %783 = vst [vmem:[#allocation10 + $0x70] sm:$0xff] %v767
    %784 = vst [vmem:[#allocation10 + $0x78] sm:$0xff] %v768
    // Predicated region
    $region42: #{res_mlp_forward.1} parent=1 // pred_check
      _
    $region43: #{res_mlp_forward.1} parent=1 // pred_check_branch
      %786 = sbr.rel (0) target = $region45
    $region44: #{res_mlp_forward.1} parent=1 // pred_region
      %788 = vsyncadd [#allocation4], 0
      %s789 = sshll.u32 [#allocation10], 4
      %s790 = int_to_ptr.vmem [resolvable:$true] %s789
      %s791 = sshll.u32 %s6, 4
      %s792 = int_to_ptr.hbm [resolvable:$true] %s791
      %797 = dma.vmem_to_hbm [thread:$0]  %s790, 2048, %s792, [#allocation4], 128, 128, 8
    $region45: #{res_mlp_forward.1} parent=1 // pred_fallthru
      _
    // Predicated region
    $region46: #{res_mlp_forward.1} parent=1 // pred_check
      _
    $region47: #{res_mlp_forward.1} parent=1 // pred_check_branch
      %799 = sbr.rel (0) target = $region49
    $region48: #{res_mlp_forward.1} parent=1 // pred_region
      %801 = dma.done [#allocation4], 2048
    $region49: #{res_mlp_forward.1} parent=1 // pred_fallthru
      _
    %802 = vsyncpa [#allocation3], 1
    %803 = vsyncpa [#allocation6], 1
    %804 = vsyncpa [#allocation9], 1
    %805 = vsyncpa [#allocation4], 1

</llo_original>
